<compile_context>
chip_gen: v6e
topology: v6e:2x2x1
jax: 0.10.0
libtpu: 0.0.40
codegen_flags: <defaults>
</compile_context>

<pallas_src>
import functools
import math

import jax
import jax.numpy as jnp
from jax.experimental import pallas as pl
from jax.experimental.pallas import tpu as pltpu


@functools.lru_cache(maxsize=None)
def _tpu_env():
    """(device_kind, vmem_capacity_bytes) with safe fallbacks."""
    kind = ""
    vmem_cap = 64 * 1024 * 1024
    try:
        kind = jax.devices()[0].device_kind.lower()
    except Exception:
        pass
    try:
        vmem_cap = int(getattr(pltpu.get_tpu_info(), "vmem_capacity_bytes", vmem_cap))
    except Exception:
        pass
    return kind, vmem_cap


def _spatial_tile(rows, s_itemsize, spatial, target_block_bytes):
    """Lane-tile size: a multiple of 128 sized so the packed (rows, tile) block
    of the network output is ~target bytes (0.5-2 MiB already hits the HBM
    roofline; bigger tiles only inflate f32 intermediates / VMEM pressure).
    Sublane padding of the rows dim is included in the estimate."""
    packing = 8 * max(1, 4 // s_itemsize)        # f32 -> 8, bf16 -> 16, 1B -> 32
    rows_pad = -(-rows // packing) * packing
    cap = (target_block_bytes // max(1, rows_pad * s_itemsize)) // 128 * 128
    cap = max(cap, 128)
    return spatial if spatial <= cap else cap


def _gdice_sums_kernel(s_ref, lbl_ref, sum_y_ref, sum_sy_ref, sum_s_ref, *,
                       batch, num_classes, tile_s, spatial_size, nk, nt,
                       needs_tail):
    """Accumulate per-(b, c) spatial sums over one spatial tile.

    s_ref:     (B*C, TS) tile of the network output (native dtype).
    lbl_ref:   (B, TS) tile of integer class labels.
    sum_*_ref: (B*C, 1) f32 accumulators, resident across the reduction axis.
    """
    rows = batch * num_classes
    k = pl.program_id(1)

    @pl.when(k == 0)
    def _init():
        sum_y_ref[...] = jnp.zeros_like(sum_y_ref)
        sum_sy_ref[...] = jnp.zeros_like(sum_sy_ref)
        sum_s_ref[...] = jnp.zeros_like(sum_s_ref)

    s = s_ref[...].astype(jnp.float32)            # (B*C, TS), sublane-packed
    lbl = lbl_ref[...]                            # (B, TS) integer labels

    # Expand labels so row r = b*C + c sees lbl[b, :] and build the per-row
    # class id c = r - b*C.  Built only from sublane-broadcast + iota + select
    # (no sublane concat / reshape), so it lowers on every TPU generation; the
    # per-element cost (~2B-1 int ops) is far below the >=2x vreg
    # under-occupancy a (B, C, TS) layout would pay on *every* op.
    row = jax.lax.broadcasted_iota(jnp.int32, (rows, 1), 0)        # (B*C, 1)
    lbl_exp = jnp.broadcast_to(lbl[0:1, :], (rows, tile_s))
    cls = row
    for b in range(1, batch):
        in_b = row >= b * num_classes                              # (B*C, 1)
        lbl_exp = jnp.where(in_b,
                            jnp.broadcast_to(lbl[b:b + 1, :], (rows, tile_s)),
                            lbl_exp)
        cls = jnp.where(in_b, row - b * num_classes, cls)

    cls_mask = lbl_exp == cls.astype(lbl_exp.dtype)                # (B*C, TS)

    def _accumulate(mask, s_for_sum):
        # No f32 one-hot tensor and no y*s multiply: two selects + 3 add chains.
        # TODO(synk): on v7x the three add chains could be routed through the
        # idle MXU (dot against a ones vector) to unload the VALU slot.
        sum_y_ref[...] += jnp.sum(jnp.where(mask, 1.0, 0.0),
                                  axis=-1, keepdims=True)
        sum_sy_ref[...] += jnp.sum(jnp.where(mask, s, 0.0),
                                   axis=-1, keepdims=True)
        sum_s_ref[...] += jnp.sum(s_for_sum, axis=-1, keepdims=True)

    if not needs_tail:
        _accumulate(cls_mask, s)
    else:
        # Only the single tail tile pays the column-validity mask; every other
        # tile runs the unmasked path (pl.when gates the two variants).
        t = pl.program_id(0) * nk + k                 # global spatial tile id
        is_tail = t == nt - 1

        @pl.when(jnp.logical_not(is_tail))
        def _body():
            _accumulate(cls_mask, s)

        @pl.when(is_tail)
        def _tail():
            lane = jax.lax.broadcasted_iota(jnp.int32, (1, tile_s), 1)
            valid = lane < (spatial_size - (nt - 1) * tile_s)
            _accumulate(jnp.logical_and(cls_mask, valid),
                        jnp.where(valid, s, 0.0))


def _gdice_sums(s2d, lbl2d, *, batch, num_classes, target_block_bytes=1 << 20):
    """Per-(b, c) spatial sums sum(y), sum(s*y), sum(s) as (B, C) f32 arrays.

    s2d:   (B*C, S) network output, native dtype, sublane-packed rows.
    lbl2d: (B, S) integer class labels (kept in their narrow dtype).
    """
    rows, spatial = s2d.shape
    assert rows == batch * num_classes
    assert lbl2d.shape == (batch, spatial)
    s_isz = jnp.dtype(s2d.dtype).itemsize

    tile_s = _spatial_tile(rows, s_isz, spatial, target_block_bytes)
    nt = -(-spatial // tile_s)                       # number of spatial tiles
    needs_tail = (spatial % tile_s) != 0

    kind, vmem_cap = _tpu_env()
    # 2-way split of the spatial tiles only where there are 2 TensorCores per
    # chip (v7x) and it divides evenly (never a phantom tile); on v5e/v6e the
    # split would only add a serial grid step.
    is_v7x = ("v7" in kind) or ("tpu7" in kind)
    num_par = 2 if (is_v7x and nt >= 2 and nt % 2 == 0) else 1
    nk = nt // num_par
    # Generation-aware VMEM allowance; actual per-step footprint is a few MiB
    # (two ~1 MiB double-buffered s blocks + small label blocks + f32 temps).
    vmem_limit = int(max(32 * 2**20, min(vmem_cap // 2, 64 * 2**20)))

    s_spec = pl.BlockSpec((rows, tile_s), lambda p, k: (0, p * nk + k))
    l_spec = pl.BlockSpec((batch, tile_s), lambda p, k: (0, p * nk + k))
    o_spec = pl.BlockSpec((None, rows, 1), lambda p, k: (p, 0, 0))

    kernel = functools.partial(
        _gdice_sums_kernel,
        batch=batch, num_classes=num_classes, tile_s=tile_s,
        spatial_size=spatial, nk=nk, nt=nt, needs_tail=needs_tail)

    out_shape = [jax.ShapeDtypeStruct((num_par, rows, 1), jnp.float32)] * 3

    sum_y, sum_sy, sum_s = pl.pallas_call(
        kernel,
        out_shape=out_shape,
        grid_spec=pltpu.PrefetchScalarGridSpec(
            num_scalar_prefetch=0,
            grid=(num_par, nk),                      # reduction axis last
            in_specs=[s_spec, l_spec],
            out_specs=[o_spec, o_spec, o_spec],
        ),
        compiler_params=pltpu.CompilerParams(
            dimension_semantics=("parallel", "arbitrary"),
            vmem_limit_bytes=vmem_limit,
        ),
    )(s2d, lbl2d)

    def _finish(x):                                  # (num_par, B*C, 1) -> (B, C)
        return x.sum(axis=0).reshape(batch, num_classes)

    return _finish(sum_y), _finish(sum_sy), _finish(sum_s)


@functools.partial(jax.jit, static_argnames=("smooth", "target_block_bytes"))
def gdice_loss(net_output, gt, smooth=1e-5, target_block_bytes=1 << 20):
    """Generalized Dice loss (apply_nonlin=None), matching GDiceLoss.forward.

    net_output: (B, C, *spatial) float, used as-is (any float dtype).
    gt:         (B, *spatial) or (B, 1, *spatial) integer class labels; the
                module's scatter_ one-hot is realised implicitly in-kernel.
    Returns a scalar (float32).
    """
    B, C = net_output.shape[:2]
    S = math.prod(net_output.shape[2:])

    if gt.ndim == net_output.ndim:
        if gt.shape[1] == 1:
            gt = jnp.squeeze(gt, axis=1)
        else:
            # TODO(synk): the module's "gt already one-hot / soft labels"
            # branch (gt.shape == net_output.shape) is not supported here.
            raise NotImplementedError(
                "one-hot / soft gt is not supported by the Pallas GDice kernel")

    s2d = net_output.reshape(B * C, S)               # free reshape, native dtype
    lbl = gt.reshape(B, S)
    if not jnp.issubdtype(lbl.dtype, jnp.integer) or lbl.dtype.itemsize > 4:
        lbl = lbl.astype(jnp.int32)                  # keep int8/int16/int32 as-is

    sum_y, sum_sy, sum_s = _gdice_sums(
        s2d, lbl, batch=B, num_classes=C,
        target_block_bytes=target_block_bytes)

    # Tiny per-(b, c) epilogue, identical to the PyTorch einsum chain.
    w = 1.0 / (sum_y + 1e-10) ** 2
    intersection = w * sum_sy
    union = w * (sum_s + sum_y)
    divided = 1.0 - 2.0 * (jnp.sum(intersection, axis=-1) + smooth) / (
        jnp.sum(union, axis=-1) + smooth)
    return jnp.mean(divided)


def _reference_gdice(net_output, gt, smooth=1e-5):
    """Pure-JAX reference mirroring the PyTorch forward (apply_nonlin=None)."""
    C = net_output.shape[1]
    s = net_output.astype(jnp.float32)
    y = jax.nn.one_hot(gt, C, axis=1, dtype=jnp.float32)       # (B, C, X, Y, Z)
    sum_y = jnp.einsum("bcxyz->bc", y)
    sum_sy = jnp.einsum("bcxyz,bcxyz->bc", s, y)
    sum_s = jnp.einsum("bcxyz->bc", s)
    w = 1.0 / (sum_y + 1e-10) ** 2
    intersection = w * sum_sy
    union = w * (sum_s + sum_y)
    divided = 1.0 - 2.0 * (jnp.sum(intersection, -1) + smooth) / (
        jnp.sum(union, -1) + smooth)
    return jnp.mean(divided)


if __name__ == "__main__":
    key = jax.random.PRNGKey(0)
    k1, k2, k3, k4 = jax.random.split(key, 4)

    # Check 1: single-tile path (S = 512 fits one spatial tile).
    B, C, X, Y, Z = 2, 4, 8, 8, 8
    net_output = jax.random.uniform(k1, (B, C, X, Y, Z), dtype=jnp.float32)
    gt_labels = jax.random.randint(k2, (B, X, Y, Z), 0, C)
    loss = jax.block_until_ready(gdice_loss(net_output, gt_labels))
    ref = jax.block_until_ready(_reference_gdice(net_output, gt_labels))
    assert jnp.allclose(loss, ref, atol=1e-5, rtol=1e-5), (loss, ref)

    # Check 2: force tiny tiles to exercise the multi-tile accumulation and the
    # pl.when-gated tail mask (S = 630 is not a multiple of the 128-wide tile).
    B2, C2, X2, Y2, Z2 = 2, 4, 5, 9, 14
    net2 = jax.random.uniform(k3, (B2, C2, X2, Y2, Z2), dtype=jnp.float32)
    gt2 = jax.random.randint(k4, (B2, X2, Y2, Z2), 0, C2)
    loss2 = jax.block_until_ready(gdice_loss(net2, gt2, target_block_bytes=1024))
    ref2 = jax.block_until_ready(_reference_gdice(net2, gt2))
    assert jnp.allclose(loss2, ref2, atol=1e-5, rtol=1e-5), (loss2, ref2)

    print("KERNEL_OK")
</pallas_src>

<mosaic_0001>
module attributes {stable_mosaic.version = 11 : i64} {
  func.func @_gdice_sums_kernel(%arg0: i32, %arg1: i32, %arg2: memref<8x512xf32, #tpu.memory_space<vmem>>, %arg3: memref<2x512xi32, #tpu.memory_space<vmem>>, %arg4: memref<1x8x1xf32, #tpu.memory_space<vmem>>, %arg5: memref<1x8x1xf32, #tpu.memory_space<vmem>>, %arg6: memref<1x8x1xf32, #tpu.memory_space<vmem>>) attributes {dimension_semantics = [#tpu.dimension_semantics<parallel>, #tpu.dimension_semantics<arbitrary>], iteration_bounds = array<i64: 1, 1>, scalar_prefetch = 0 : i64, scratch_operands = 0 : i64, tpu.core_type = #tpu.core_type<tc>, window_params = [{transform_indices = @transform_0, window_bounds = array<i64: 8, 512>}, {transform_indices = @transform_1, window_bounds = array<i64: 2, 512>}, {transform_indices = @transform_2, window_bounds = array<i64: 1, 8, 1>}, {transform_indices = @transform_3, window_bounds = array<i64: 1, 8, 1>}, {transform_indices = @transform_4, window_bounds = array<i64: 1, 8, 1>}]} {
    %c0_i32 = arith.constant 0 : i32
    %0 = arith.cmpi eq, %arg1, %c0_i32 : i32
    %1 = arith.extui %0 : i1 to i32
    %c0_i32_0 = arith.constant 0 : i32
    %2 = arith.cmpi ne, %1, %c0_i32_0 : i32
    scf.if %2 {
      %cst_28 = arith.constant 0.000000e+00 : f32
      %51 = vector.broadcast %cst_28 : f32 to vector<8x1xf32>
      %c0_29 = arith.constant 0 : index
      %c0_30 = arith.constant 0 : index
      %c0_31 = arith.constant 0 : index
      %52 = vector.load %arg4[%c0_29, %c0_30, %c0_31] : memref<1x8x1xf32, #tpu.memory_space<vmem>>, vector<1x8x1xf32>
      %53 = vector.shape_cast %52 : vector<1x8x1xf32> to vector<8x1xf32>
      %54 = vector.shape_cast %51 : vector<8x1xf32> to vector<1x8x1xf32>
      tpu.vector_store %arg4[%c0_29, %c0_30, %c0_31], %54 {strides = array<i32>} : memref<1x8x1xf32, #tpu.memory_space<vmem>>, vector<1x8x1xf32>,
      %cst_32 = arith.constant 0.000000e+00 : f32
      %55 = vector.broadcast %cst_32 : f32 to vector<8x1xf32>
      %c0_33 = arith.constant 0 : index
      %c0_34 = arith.constant 0 : index
      %c0_35 = arith.constant 0 : index
      %56 = vector.load %arg5[%c0_33, %c0_34, %c0_35] : memref<1x8x1xf32, #tpu.memory_space<vmem>>, vector<1x8x1xf32>
      %57 = vector.shape_cast %56 : vector<1x8x1xf32> to vector<8x1xf32>
      %58 = vector.shape_cast %55 : vector<8x1xf32> to vector<1x8x1xf32>
      tpu.vector_store %arg5[%c0_33, %c0_34, %c0_35], %58 {strides = array<i32>} : memref<1x8x1xf32, #tpu.memory_space<vmem>>, vector<1x8x1xf32>,
      %cst_36 = arith.constant 0.000000e+00 : f32
      %59 = vector.broadcast %cst_36 : f32 to vector<8x1xf32>
      %c0_37 = arith.constant 0 : index
      %c0_38 = arith.constant 0 : index
      %c0_39 = arith.constant 0 : index
      %60 = vector.load %arg6[%c0_37, %c0_38, %c0_39] : memref<1x8x1xf32, #tpu.memory_space<vmem>>, vector<1x8x1xf32>
      %61 = vector.shape_cast %60 : vector<1x8x1xf32> to vector<8x1xf32>
      %62 = vector.shape_cast %59 : vector<8x1xf32> to vector<1x8x1xf32>
      tpu.vector_store %arg6[%c0_37, %c0_38, %c0_39], %62 {strides = array<i32>} : memref<1x8x1xf32, #tpu.memory_space<vmem>>, vector<1x8x1xf32>,
    } else {
    }
    %c0 = arith.constant 0 : index
    %c0_1 = arith.constant 0 : index
    %3 = vector.load %arg2[%c0, %c0_1] : memref<8x512xf32, #tpu.memory_space<vmem>>, vector<8x512xf32>
    %c0_2 = arith.constant 0 : index
    %c0_3 = arith.constant 0 : index
    %4 = vector.load %arg3[%c0_2, %c0_3] : memref<2x512xi32, #tpu.memory_space<vmem>>, vector<2x512xi32>
    %5 = tpu.iota {dimensions = array<i32: 0>} : vector<8x1xi32>
    %6 = vector.extract_strided_slice %4 {offsets = [0, 0], sizes = [1, 512], strides = [1, 1]} : vector<2x512xi32> to vector<1x512xi32>
    %7 = vector.shape_cast %6 : vector<1x512xi32> to vector<1x512xi32>
    %8 = vector.broadcast %7 : vector<1x512xi32> to vector<8x512xi32>
    %c4_i32 = arith.constant 4 : i32
    %9 = vector.broadcast %c4_i32 : i32 to vector<8x1xi32>
    %10 = arith.cmpi sge, %5, %9 : vector<8x1xi32>
    %11 = vector.extract_strided_slice %4 {offsets = [1, 0], sizes = [1, 512], strides = [1, 1]} : vector<2x512xi32> to vector<1x512xi32>
    %12 = vector.shape_cast %11 : vector<1x512xi32> to vector<1x512xi32>
    %13 = vector.broadcast %12 : vector<1x512xi32> to vector<8x512xi32>
    %14 = vector.shape_cast %10 : vector<8x1xi1> to vector<8x1xi1>
    %15 = vector.broadcast %14 : vector<8x1xi1> to vector<8x512xi1>
    %16 = arith.select %15, %13, %8 : vector<8x512xi1>, vector<8x512xi32>
    %c4_i32_4 = arith.constant 4 : i32
    %17 = vector.broadcast %c4_i32_4 : i32 to vector<8x1xi32>
    %18 = arith.subi %5, %17 : vector<8x1xi32>
    %19 = arith.select %10, %18, %5 : vector<8x1xi1>, vector<8x1xi32>
    %20 = vector.broadcast %19 : vector<8x1xi32> to vector<8x512xi32>
    %21 = arith.cmpi eq, %16, %20 : vector<8x512xi32>
    %c0_5 = arith.constant 0 : index
    %c0_6 = arith.constant 0 : index
    %c0_7 = arith.constant 0 : index
    %22 = vector.load %arg4[%c0_5, %c0_6, %c0_7] : memref<1x8x1xf32, #tpu.memory_space<vmem>>, vector<1x8x1xf32>
    %23 = vector.shape_cast %22 : vector<1x8x1xf32> to vector<8x1xf32>
    %cst = arith.constant 1.000000e+00 : f32
    %cst_8 = arith.constant 0.000000e+00 : f32
    %24 = vector.broadcast %cst : f32 to vector<8x512xf32>
    %25 = vector.broadcast %cst_8 : f32 to vector<8x512xf32>
    %26 = arith.select %21, %24, %25 : vector<8x512xi1>, vector<8x512xf32>
    %cst_9 = arith.constant dense<0.000000e+00> : vector<8xf32>
    %27 = vector.multi_reduction <add>, %26, %cst_9 [1] : vector<8x512xf32> to vector<8xf32>
    %28 = vector.shape_cast %27 : vector<8xf32> to vector<8x1xf32>
    %29 = arith.addf %23, %28 : vector<8x1xf32>
    %c0_10 = arith.constant 0 : index
    %c0_11 = arith.constant 0 : index
    %c0_12 = arith.constant 0 : index
    %30 = vector.load %arg4[%c0_10, %c0_11, %c0_12] : memref<1x8x1xf32, #tpu.memory_space<vmem>>, vector<1x8x1xf32>
    %31 = vector.shape_cast %30 : vector<1x8x1xf32> to vector<8x1xf32>
    %32 = vector.shape_cast %29 : vector<8x1xf32> to vector<1x8x1xf32>
    tpu.vector_store %arg4[%c0_10, %c0_11, %c0_12], %32 {strides = array<i32>} : memref<1x8x1xf32, #tpu.memory_space<vmem>>, vector<1x8x1xf32>,
    %c0_13 = arith.constant 0 : index
    %c0_14 = arith.constant 0 : index
    %c0_15 = arith.constant 0 : index
    %33 = vector.load %arg5[%c0_13, %c0_14, %c0_15] : memref<1x8x1xf32, #tpu.memory_space<vmem>>, vector<1x8x1xf32>
    %34 = vector.shape_cast %33 : vector<1x8x1xf32> to vector<8x1xf32>
    %cst_16 = arith.constant 0.000000e+00 : f32
    %35 = vector.broadcast %cst_16 : f32 to vector<8x512xf32>
    %36 = arith.select %21, %3, %35 : vector<8x512xi1>, vector<8x512xf32>
    %cst_17 = arith.constant dense<0.000000e+00> : vector<8xf32>
    %37 = vector.multi_reduction <add>, %36, %cst_17 [1] : vector<8x512xf32> to vector<8xf32>
    %38 = vector.shape_cast %37 : vector<8xf32> to vector<8x1xf32>
    %39 = arith.addf %34, %38 : vector<8x1xf32>
    %c0_18 = arith.constant 0 : index
    %c0_19 = arith.constant 0 : index
    %c0_20 = arith.constant 0 : index
    %40 = vector.load %arg5[%c0_18, %c0_19, %c0_20] : memref<1x8x1xf32, #tpu.memory_space<vmem>>, vector<1x8x1xf32>
    %41 = vector.shape_cast %40 : vector<1x8x1xf32> to vector<8x1xf32>
    %42 = vector.shape_cast %39 : vector<8x1xf32> to vector<1x8x1xf32>
    tpu.vector_store %arg5[%c0_18, %c0_19, %c0_20], %42 {strides = array<i32>} : memref<1x8x1xf32, #tpu.memory_space<vmem>>, vector<1x8x1xf32>,
    %c0_21 = arith.constant 0 : index
    %c0_22 = arith.constant 0 : index
    %c0_23 = arith.constant 0 : index
    %43 = vector.load %arg6[%c0_21, %c0_22, %c0_23] : memref<1x8x1xf32, #tpu.memory_space<vmem>>, vector<1x8x1xf32>
    %44 = vector.shape_cast %43 : vector<1x8x1xf32> to vector<8x1xf32>
    %cst_24 = arith.constant dense<0.000000e+00> : vector<8xf32>
    %45 = vector.multi_reduction <add>, %3, %cst_24 [1] : vector<8x512xf32> to vector<8xf32>
    %46 = vector.shape_cast %45 : vector<8xf32> to vector<8x1xf32>
    %47 = arith.addf %44, %46 : vector<8x1xf32>
    %c0_25 = arith.constant 0 : index
    %c0_26 = arith.constant 0 : index
    %c0_27 = arith.constant 0 : index
    %48 = vector.load %arg6[%c0_25, %c0_26, %c0_27] : memref<1x8x1xf32, #tpu.memory_space<vmem>>, vector<1x8x1xf32>
    %49 = vector.shape_cast %48 : vector<1x8x1xf32> to vector<8x1xf32>
    %50 = vector.shape_cast %47 : vector<8x1xf32> to vector<1x8x1xf32>
    tpu.vector_store %arg6[%c0_25, %c0_26, %c0_27], %50 {strides = array<i32>} : memref<1x8x1xf32, #tpu.memory_space<vmem>>, vector<1x8x1xf32>,
    return
  }
  func.func @transform_0(%arg0: i32, %arg1: i32) -> (i32, i32) {
    %c1_i32 = arith.constant 1 : i32
    %0 = arith.muli %arg0, %c1_i32 : i32
    %1 = arith.addi %0, %arg1 : i32
    %c0_i32 = arith.constant 0 : i32
    %c0_i32_0 = arith.constant 0 : i32
    return %c0_i32, %1 : i32, i32
  }
  func.func @transform_1(%arg0: i32, %arg1: i32) -> (i32, i32) {
    %c1_i32 = arith.constant 1 : i32
    %0 = arith.muli %arg0, %c1_i32 : i32
    %1 = arith.addi %0, %arg1 : i32
    %c0_i32 = arith.constant 0 : i32
    %c0_i32_0 = arith.constant 0 : i32
    return %c0_i32, %1 : i32, i32
  }
  func.func @transform_2(%arg0: i32, %arg1: i32) -> (i32, i32, i32) {
    %c0_i32 = arith.constant 0 : i32
    %c0_i32_0 = arith.constant 0 : i32
    %c0_i32_1 = arith.constant 0 : i32
    return %arg0, %c0_i32, %c0_i32_0 : i32, i32, i32
  }
  func.func @transform_3(%arg0: i32, %arg1: i32) -> (i32, i32, i32) {
    %c0_i32 = arith.constant 0 : i32
    %c0_i32_0 = arith.constant 0 : i32
    %c0_i32_1 = arith.constant 0 : i32
    return %arg0, %c0_i32, %c0_i32_0 : i32, i32, i32
  }
  func.func @transform_4(%arg0: i32, %arg1: i32) -> (i32, i32, i32) {
    %c0_i32 = arith.constant 0 : i32
    %c0_i32_0 = arith.constant 0 : i32
    %c0_i32_1 = arith.constant 0 : i32
    return %arg0, %c0_i32, %c0_i32_0 : i32, i32, i32
  }
}

</mosaic_0001>

<llo_original>
// kernel: gdice_loss.1
$region0: #{gdice_loss.1}
  #allocation0 [shape = 'u32[]', space=smem, size = 0x4, offset = 0x4, fixed_abs, tag = 'smem constant byte address 0x4 - core index']
  #allocation1 [shape = 'u32[144,128]{1,0:T(1,128)}', space=vmem, size = 0x12000, scoped, tag = 'internal scratch']
  %s0 = inlined_call_operand.vmem [shape: f32[8,512], index: 0, kind: input, shape index: {}]
  %s1 = inlined_call_operand.vmem [shape: s32[2,512], index: 1, kind: input, shape index: {}]
  %s2 = inlined_call_operand.vmem [shape: f32[1,8,1], index: 2, kind: output, shape index: {0}]
  %s3 = inlined_call_operand.vmem [shape: f32[1,8,1], index: 3, kind: output, shape index: {1}]
  %s4 = inlined_call_operand.vmem [shape: f32[1,8,1], index: 4, kind: output, shape index: {2}]
  %5 = xla_tuple %s2, %s3, %s4
  %s6 = sld [smem:[#allocation0]]
  $region38: #{gdice_loss.1} parent=0
    _
  %s8 = ssub.s32 1, %s6
  %s9 = scalar_select 0, %s8, %s6
  // Predicated region
  $region2: #{gdice_loss.1} parent=0 // pred_check
    _
  $region3: #{gdice_loss.1} parent=0 // pred_check_branch
    %11 = sbr.rel (0) target = $region5
  $region4: #{gdice_loss.1} parent=0 // pred_region
    %s12 = sadd.s32 0, 0
    %s13 = smul.u32 4, %s12
    %p14 = scmp.lt.s32.totalorder %s13, 3
    %s15 = scalar_select %p14, %s13, 3
    %s16 = smul.addr %s15, 8
    %s17 = scalar_lea.vmem %s0, %s16
    %s18 = sadd.s32 0, 0
    %s19 = smul.u32 4, %s18
  $region5: #{gdice_loss.1} parent=0 // pred_fallthru
    _
  // Predicated region
  $region6: #{gdice_loss.1} parent=0 // pred_check
    _
  $region7: #{gdice_loss.1} parent=0 // pred_check_branch
    %21 = sbr.rel (0) target = $region9
  $region8: #{gdice_loss.1} parent=0 // pred_region
    %s22 = sadd.s32 0, 0
    %s23 = smul.u32 4, %s22
    %p24 = scmp.lt.s32.totalorder %s23, 3
    %s25 = scalar_select %p24, %s23, 3
    %s26 = smul.addr %s25, 2
    %s27 = scalar_lea.vmem %s1, %s26
    %s28 = sadd.s32 0, 0
    %s29 = smul.u32 4, %s28
  $region9: #{gdice_loss.1} parent=0 // pred_fallthru
    _
  %s30 = sadd.s32 0, 0
  %s31 = smul.u32 4, %s30
  %p32 = scmp.lt.s32.totalorder %s31, 3
  %s33 = scalar_select %p32, %s31, 3
  %s34 = smul.addr %s33, 8
  %s35 = scalar_lea.vmem %s0, %s34
  %s36 = sadd.s32 0, 0
  %s37 = smul.u32 4, %s36
  %p38 = scmp.lt.s32.totalorder %s37, 3
  %s39 = scalar_select %p38, %s37, 3
  %s40 = smul.addr %s39, 2
  %s41 = scalar_lea.vmem %s1, %s40
  %s42 = sadd.s32 0, 0
  %s43 = smul.u32 4, %s42
  %p44 = scmp.lt.s32.totalorder %s43, 3
  %s45 = scalar_select %p44, %s43, 3
  %s46 = smul.addr %s45, 8
  %s47 = scalar_lea.vmem %s0, %s46
  %s48 = sadd.s32 0, 0
  %s49 = smul.u32 4, %s48
  %s50 = sadd.s32 0, 0
  %s51 = smul.u32 4, %s50
  %p52 = scmp.lt.s32.totalorder %s51, 3
  %s53 = scalar_select %p52, %s51, 3
  %s54 = smul.addr %s53, 2
  %s55 = scalar_lea.vmem %s1, %s54
  %s56 = sadd.s32 0, 0
  %s57 = smul.u32 4, %s56
  %p58 = scmp.eq.s32.totalorder 0, 0
  // Predicated region
  $region10: #{gdice_loss.1} parent=0 // pred_check
    %p59 = pneg %p58
  $region11: #{gdice_loss.1} parent=0 // pred_check_branch
    %61 = sbr.rel (%p59) target = $region13
  $region12: #{gdice_loss.1} parent=0 // pred_region
    %vm62 = vcmask 7168
    %63 = vst.msk [vmem:[%s2] sm:$0xff] %vm62, 0.0
    %64 = vst.msk [vmem:[%s3] sm:$0xff] %vm62, 0.0
    %65 = vst.msk [vmem:[%s4] sm:$0xff] %vm62, 0.0
  $region13: #{gdice_loss.1} parent=0 // pred_fallthru
    _
  %v66 = vld [vmem:[%s47] sm:$0xff]
  %v67 = vld [vmem:[%s47 + $0x8] sm:$0xff]
  %v68 = vld [vmem:[%s47 + $0x10] sm:$0xff]
  %v69 = vld [vmem:[%s47 + $0x18] sm:$0xff]
  %v70 = vld [vmem:[%s55] sm:$0xff]
  %v71 = vlaneseq
  %v72 = vshrl.u32 %v71, 7
  %v73 = vlaneseq
  %v74 = vshrl.u32 %v73, 7
  %v75 = vsub.s32 0, %v74
  %v76 = vrot.slane %v70, %v75
  %v77 = vlaneseq
  %v78 = vshrl.u32 %v77, 7
  %v79 = vsub.s32 2, %v78
  %v80 = vrot.slane %v70, %v79
  %v81 = vlaneseq
  %v82 = vshrl.u32 %v81, 7
  %v83 = vsub.s32 4, %v82
  %v84 = vrot.slane %v70, %v83
  %v85 = vlaneseq
  %v86 = vshrl.u32 %v85, 7
  %v87 = vsub.s32 6, %v86
  %v88 = vrot.slane %v70, %v87
  %v89 = vlaneseq
  %v90 = vshrl.u32 %v89, 7
  %v91 = vsub.s32 0, %v90
  %v92 = vrot.slane %v76, %v91
  %v93 = vlaneseq
  %v94 = vshrl.u32 %v93, 7
  %v95 = vsub.s32 0, %v94
  %v96 = vrot.slane %v80, %v95
  %v97 = vlaneseq
  %v98 = vshrl.u32 %v97, 7
  %v99 = vsub.s32 0, %v98
  %v100 = vrot.slane %v84, %v99
  %v101 = vlaneseq
  %v102 = vshrl.u32 %v101, 7
  %v103 = vsub.s32 0, %v102
  %v104 = vrot.slane %v88, %v103
  %vm105 = vcmp.ge.s32.totalorder %v72, 4
  %v106 = vlaneseq
  %v107 = vshrl.u32 %v106, 7
  %v108 = vsub.s32 1, %v107
  %v109 = vrot.slane %v70, %v108
  %v110 = vlaneseq
  %v111 = vshrl.u32 %v110, 7
  %v112 = vsub.s32 3, %v111
  %v113 = vrot.slane %v70, %v112
  %v114 = vlaneseq
  %v115 = vshrl.u32 %v114, 7
  %v116 = vsub.s32 5, %v115
  %v117 = vrot.slane %v70, %v116
  %v118 = vlaneseq
  %v119 = vshrl.u32 %v118, 7
  %v120 = vsub.s32 7, %v119
  %v121 = vrot.slane %v70, %v120
  %v122 = vlaneseq
  %v123 = vshrl.u32 %v122, 7
  %v124 = vsub.s32 1, %v123
  %v125 = vrot.slane %v109, %v124
  %v126 = vlaneseq
  %v127 = vshrl.u32 %v126, 7
  %v128 = vsub.s32 1, %v127
  %v129 = vrot.slane %v113, %v128
  %v130 = vlaneseq
  %v131 = vshrl.u32 %v130, 7
  %v132 = vsub.s32 1, %v131
  %v133 = vrot.slane %v117, %v132
  %v134 = vlaneseq
  %v135 = vshrl.u32 %v134, 7
  %v136 = vsub.s32 1, %v135
  %v137 = vrot.slane %v121, %v136
  %v138 = vsel %vm105, 1, 0
  %vm139 = vcmp.eq.s32.totalorder %v138, 1
  %v140 = vsel %vm139, %v125, %v92
  %v141 = vsel %vm139, %v129, %v96
  %v142 = vsel %vm139, %v133, %v100
  %v143 = vsel %vm139, %v137, %v104
  %v144 = vsub.s32 %v72, 4
  %v145 = vsel %vm105, %v144, %v72
  %vm146 = vcmp.eq.s32.totalorder %v140, %v145
  %vm147 = vcmp.eq.s32.totalorder %v141, %v145
  %vm148 = vcmp.eq.s32.totalorder %v142, %v145
  %vm149 = vcmp.eq.s32.totalorder %v143, %v145
  %v150 = vld [vmem:[%s2] sm:$0xff]
  %v151 = vsel %vm146, 1.0, 0.0
  %v152 = vsel %vm147, 1.0, 0.0
  %v153 = vsel %vm148, 1.0, 0.0
  %v154 = vsel %vm149, 1.0, 0.0
  %v155 = vadd.f32 %v151, %v152
  %v156 = vadd.f32 %v155, %v153
  %v157 = vadd.f32 %v156, %v154
  %158 = vadd.xlane.f32.xlu0 %v157
  %v159 = vpop.xlane.xlu0 %158
  %v160 = vadd.f32 %v150, %v159
  %vm161 = vcmask 7168
  %162 = vst.msk [vmem:[%s2] sm:$0xff] %vm161, %v160
  %v163 = vld [vmem:[%s3] sm:$0xff]
  %v164 = vsel %vm146, %v66, 0.0
  %v165 = vsel %vm147, %v67, 0.0
  %v166 = vsel %vm148, %v68, 0.0
  %v167 = vsel %vm149, %v69, 0.0
  %v168 = vadd.f32 %v164, %v165
  %v169 = vadd.f32 %v168, %v166
  %v170 = vadd.f32 %v169, %v167
  %171 = vadd.xlane.f32.xlu0 %v170
  %v172 = vpop.xlane.xlu0 %171
  %v173 = vadd.f32 %v163, %v172
  %174 = vst.msk [vmem:[%s3] sm:$0xff] %vm161, %v173
  %v175 = vld [vmem:[%s4] sm:$0xff]
  %v176 = vadd.f32 %v66, %v67
  %v177 = vadd.f32 %v176, %v68
  %v178 = vadd.f32 %v177, %v69
  %179 = vadd.xlane.f32.xlu0 %v178
  %v180 = vpop.xlane.xlu0 %179
  %v181 = vadd.f32 %v175, %v180
  %182 = vst.msk [vmem:[%s4] sm:$0xff] %vm161, %v181
  // Predicated region
  $region14: #{gdice_loss.1} parent=0 // pred_check
    _
  $region15: #{gdice_loss.1} parent=0 // pred_check_branch
    %184 = sbr.rel (0) target = $region17
  $region16: #{gdice_loss.1} parent=0 // pred_region
    _
  $region17: #{gdice_loss.1} parent=0 // pred_fallthru
    _
  // Predicated region
  $region18: #{gdice_loss.1} parent=0 // pred_check
    _
  $region19: #{gdice_loss.1} parent=0 // pred_check_branch
    %186 = sbr.rel (0) target = $region21
  $region20: #{gdice_loss.1} parent=0 // pred_region
    _
  $region21: #{gdice_loss.1} parent=0 // pred_fallthru
    _
  // Predicated region
  $region22: #{gdice_loss.1} parent=0 // pred_check
    _
  $region23: #{gdice_loss.1} parent=0 // pred_check_branch
    %188 = sbr.rel (0) target = $region25
  $region24: #{gdice_loss.1} parent=0 // pred_region
    _
  $region25: #{gdice_loss.1} parent=0 // pred_fallthru
    _
  // Predicated region
  $region26: #{gdice_loss.1} parent=0 // pred_check
    _
  $region27: #{gdice_loss.1} parent=0 // pred_check_branch
    %190 = sbr.rel (0) target = $region29
  $region28: #{gdice_loss.1} parent=0 // pred_region
    _
  $region29: #{gdice_loss.1} parent=0 // pred_fallthru
    _
  // Predicated region
  $region30: #{gdice_loss.1} parent=0 // pred_check
    _
  $region31: #{gdice_loss.1} parent=0 // pred_check_branch
    %192 = sbr.rel (0) target = $region33
  $region32: #{gdice_loss.1} parent=0 // pred_region
    _
  $region33: #{gdice_loss.1} parent=0 // pred_fallthru
    _
  // Predicated region
  $region34: #{gdice_loss.1} parent=0 // pred_check
    _
  $region35: #{gdice_loss.1} parent=0 // pred_check_branch
    %194 = sbr.rel (0) target = $region37
  $region36: #{gdice_loss.1} parent=0 // pred_region
    _
  $region37: #{gdice_loss.1} parent=0 // pred_fallthru
    _

</llo_original>
